<compile_context>
chip_gen: v5e
topology: v5e:2x2
jax: 0.10.0
libtpu: 0.0.40
codegen_flags: <defaults>
</compile_context>

<pallas_src>
import jax
import jax.numpy as jnp
from jax.experimental import pallas as pl
from jax.experimental.pallas import tpu as pltpu

# ---------------- model dims (small, consistent with the module) -------------
VOCAB = 100          # len(TEXT.vocab) stand-in
EMB = 32             # emb_dim (module default 300; scaled down for this harness)
HID = 32             # hidden_dim
NUM_CLASSES = 6
SEQ_LEN = 8
BATCH = 2

BATCH_PAD = 8                        # sublane-aligned batch
ROWS = SEQ_LEN * BATCH_PAD           # 64 (t, b) rows, row = t*BATCH_PAD + b
VOCAB_PAD = 128                      # lane-dense one-hot width
GATES = 4 * HID                      # 128 gate lanes, column order i | f | o | g
HEAD_PAD = 128                       # lane-dense padded predictor width

# MXU operand dtype: bf16 inputs are single-pass on the MXU (largest effect on
# v5e / v6e serial chains).  Accumulation + all elementwise math stay f32.
MATMUL_DTYPE = jnp.bfloat16

# -------- packed weight slab layout (f32, 128 lanes, 8-row aligned rows) -----
ROW_TABLE = 0                        # (VOCAB_PAD, 128) folded emb @ W_ih
ROW_BGATE = ROW_TABLE + VOCAB_PAD    # 128  (1, 128)    b_ih + b_hh
ROW_WHH = ROW_BGATE + 8              # 136  (HID, 128)  W_hh^T
ROW_WHEAD = ROW_WHH + HID            # 168  (HID, 128)  W1^T @ Wp^T (0-padded cols)
ROW_BHEAD = ROW_WHEAD + HID          # 200  (1, 128)    b1 @ Wp^T + bp (0-padded)
SLAB_ROWS = ROW_BHEAD + 8            # 208 rows -> ~104 KiB, trivially VMEM resident


# ---------------- fused kernel: embed -> LSTM -> fused head ------------------
def fused_lstm_kernel(ids_ref,   # (ROWS, 1) int32 token ids
                      w_ref,     # (SLAB_ROWS, 128) f32 packed weights
                      out_ref):  # (BATCH_PAD, HEAD_PAD) f32
    # Static, 8-row-aligned views into the packed weight slab.
    table = w_ref[pl.ds(ROW_TABLE, VOCAB_PAD), :].astype(MATMUL_DTYPE)   # (128,128)
    b_gate = w_ref[pl.ds(ROW_BGATE, 1), :]                               # (1,128)
    whh = w_ref[pl.ds(ROW_WHH, HID), :].astype(MATMUL_DTYPE)             # (32,128)
    w_head = w_ref[pl.ds(ROW_WHEAD, HID), :].astype(MATMUL_DTYPE)        # (32,128)
    b_head = w_ref[pl.ds(ROW_BHEAD, 1), :]                               # (1,128)

    # 1. embedding + input projection for ALL steps in one matmul against the
    #    pre-folded table:  onehot(ids) @ (emb @ W_ih) + (b_ih + b_hh).
    ids = ids_ref[...]                                                   # (64,1)
    vocab_iota = jax.lax.broadcasted_iota(jnp.int32, (ROWS, VOCAB_PAD), 1)
    onehot = (vocab_iota == ids).astype(MATMUL_DTYPE)                    # (64,128)
    xw_all = (jnp.dot(onehot, table, preferred_element_type=jnp.float32)
              + b_gate)                                                  # (64,128) f32

    # 2. LSTM recurrence, fully unrolled (S=8 static); every slice starts on an
    #    8-row sublane boundary; per-step MXU work is a single h @ Whh.
    h = jnp.zeros((BATCH_PAD, HID), jnp.float32)
    c = jnp.zeros((BATCH_PAD, HID), jnp.float32)
    for t in range(SEQ_LEN):
        gates = (xw_all[t * BATCH_PAD:(t + 1) * BATCH_PAD, :]
                 + jnp.dot(h.astype(MATMUL_DTYPE), whh,
                           preferred_element_type=jnp.float32))          # (8,128)
        sig = jax.nn.sigmoid(gates)          # full-width EUP, columns i|f|o|g
        tnh = jnp.tanh(gates)                # full-width EUP
        i_g = sig[:, 0 * HID:1 * HID]
        f_g = sig[:, 1 * HID:2 * HID]
        o_g = sig[:, 2 * HID:3 * HID]
        g_g = tnh[:, 3 * HID:4 * HID]
        c = f_g * c + i_g * g_g
        h = o_g * jnp.tanh(c)

    # 3. fused head: Linear(H,H) followed by predictor(H,6) folded into one
    #    matmul; written lane-dense into the (8,128) slab (cols >= 6 are zero).
    preds = (jnp.dot(h.astype(MATMUL_DTYPE), w_head,
                     preferred_element_type=jnp.float32) + b_head)       # (8,128)
    out_ref[...] = preds


# ---------------- wrapper -----------------------------------------------------
def simple_lstm_baseline_forward(seq, params):
    """seq: (SEQ_LEN, BATCH) int32 token ids (PyTorch LSTM seq-first layout)."""
    ids = jnp.zeros((SEQ_LEN, BATCH_PAD), jnp.int32)
    ids = ids.at[:, :BATCH].set(seq.astype(jnp.int32))   # dummy rows use token 0
    ids = ids.reshape(ROWS, 1)                           # row = t*BATCH_PAD + b
    vmem = pltpu.MemorySpace.VMEM
    out = pl.pallas_call(
        fused_lstm_kernel,
        out_shape=jax.ShapeDtypeStruct((BATCH_PAD, HEAD_PAD), jnp.float32),
        in_specs=[pl.BlockSpec(memory_space=vmem),
                  pl.BlockSpec(memory_space=vmem)],
        out_specs=pl.BlockSpec(memory_space=vmem),
    )(ids, params["w_slab"])
    return out[:BATCH, :NUM_CLASSES]


# ---------------- parameter prep ----------------------------------------------
def _reorder_ifgo_to_ifog(w):
    # columns are [i | f | g | o] blocks of width HID -> reorder to [i | f | o | g]
    return jnp.concatenate(
        [w[:, :2 * HID], w[:, 3 * HID:4 * HID], w[:, 2 * HID:3 * HID]], axis=1)


def init_params(key):
    ks = jax.random.split(key, 8)
    emb = jax.random.normal(ks[0], (VOCAB, EMB), jnp.float32) * 0.1
    # PyTorch LSTM params: weight_ih (4H, E), weight_hh (4H, H), biases (4H,)
    w_ih = jax.random.normal(ks[1], (4 * HID, EMB), jnp.float32) * 0.1
    w_hh = jax.random.normal(ks[2], (4 * HID, HID), jnp.float32) * 0.1
    b_ih = jax.random.normal(ks[3], (4 * HID,), jnp.float32) * 0.1
    b_hh = jax.random.normal(ks[4], (4 * HID,), jnp.float32) * 0.1
    # Linear layers: weight (out, in), bias (out,)
    w1 = jax.random.normal(ks[5], (HID, HID), jnp.float32) * 0.1
    b1 = jax.random.normal(ks[6], (HID,), jnp.float32) * 0.1
    wp = jax.random.normal(ks[7], (NUM_CLASSES, HID), jnp.float32) * 0.1
    bp = jnp.zeros((NUM_CLASSES,), jnp.float32)

    raw = dict(emb=emb, w_ih=w_ih, w_hh=w_hh, b_ih=b_ih, b_hh=b_hh,
               w1=w1, b1=b1, wp=wp, bp=bp)

    # Gate-column permutation (i,f,g,o) -> (i,f,o,g), applied consistently.
    wih_t = _reorder_ifgo_to_ifog(w_ih.T)                          # (E, 4H)
    whh_t = _reorder_ifgo_to_ifog(w_hh.T)                          # (H, 4H)
    b_gate = _reorder_ifgo_to_ifog((b_ih + b_hh).reshape(1, 4 * HID))

    # Fold embedding with the input projection (exact: onehot.(emb.Wih)).
    xw_table = emb @ wih_t                                         # (VOCAB, 4H)
    # Fold Linear(H,H) + predictor(H,6) (exact: no nonlinearity between them).
    w_head = w1.T @ wp.T                                           # (H, 6)
    b_head = b1 @ wp.T + bp                                        # (6,)

    slab = jnp.zeros((SLAB_ROWS, 128), jnp.float32)
    slab = slab.at[ROW_TABLE:ROW_TABLE + VOCAB, :].set(xw_table)
    slab = slab.at[ROW_BGATE, :].set(b_gate[0])
    slab = slab.at[ROW_WHH:ROW_WHH + HID, :].set(whh_t)
    slab = slab.at[ROW_WHEAD:ROW_WHEAD + HID, :NUM_CLASSES].set(w_head)
    slab = slab.at[ROW_BHEAD, :NUM_CLASSES].set(b_head)

    return {"w_slab": slab, "raw": raw}


# ---------------- pure-JAX reference (PyTorch semantics, f32) -----------------
def reference_forward(seq, raw):
    x = raw["emb"][seq]                                  # (S, B, E)
    b = raw["b_ih"] + raw["b_hh"]
    h = jnp.zeros((seq.shape[1], HID), jnp.float32)
    c = jnp.zeros((seq.shape[1], HID), jnp.float32)
    for t in range(seq.shape[0]):
        g = x[t] @ raw["w_ih"].T + h @ raw["w_hh"].T + b   # gate order i,f,g,o
        i = jax.nn.sigmoid(g[:, :HID])
        f = jax.nn.sigmoid(g[:, HID:2 * HID])
        gg = jnp.tanh(g[:, 2 * HID:3 * HID])
        o = jax.nn.sigmoid(g[:, 3 * HID:])
        c = f * c + i * gg
        h = o * jnp.tanh(c)
    feat = h @ raw["w1"].T + raw["b1"]
    return feat @ raw["wp"].T + raw["bp"]


if __name__ == "__main__":
    key = jax.random.PRNGKey(0)
    pkey, skey = jax.random.split(key)
    params = init_params(pkey)
    # seq: (seq_len, batch) int32 token ids
    seq = jax.random.randint(skey, (SEQ_LEN, BATCH), 0, VOCAB, dtype=jnp.int32)

    preds = simple_lstm_baseline_forward(seq, params)
    jax.block_until_ready(preds)
    assert preds.shape == (BATCH, NUM_CLASSES)

    ref = reference_forward(seq, params["raw"])
    max_err = float(jnp.max(jnp.abs(preds - ref)))
    assert max_err < 1e-2, f"kernel/reference mismatch: max_err={max_err}"
    print("KERNEL_OK")
</pallas_src>

<mosaic_0001>
module attributes {stable_mosaic.version = 11 : i64} {
  func.func @fused_lstm_kernel(%arg0: memref<64x1xi32, #tpu.memory_space<vmem>>, %arg1: memref<208x128xf32, #tpu.memory_space<vmem>>, %arg2: memref<8x128xf32, #tpu.memory_space<vmem>>) attributes {dimension_semantics = [], scalar_prefetch = 0 : i64, scratch_operands = 0 : i64, tpu.core_type = #tpu.core_type<tc>} {
    %c0 = arith.constant 0 : index
    %c0_0 = arith.constant 0 : index
    %0 = vector.load %arg1[%c0, %c0_0] : memref<208x128xf32, #tpu.memory_space<vmem>>, vector<128x128xf32>
    %1 = arith.truncf %0 : vector<128x128xf32> to vector<128x128xbf16>
    %c128 = arith.constant 128 : index
    %c0_1 = arith.constant 0 : index
    %2 = vector.load %arg1[%c128, %c0_1] : memref<208x128xf32, #tpu.memory_space<vmem>>, vector<1x128xf32>
    %c136 = arith.constant 136 : index
    %c0_2 = arith.constant 0 : index
    %3 = vector.load %arg1[%c136, %c0_2] : memref<208x128xf32, #tpu.memory_space<vmem>>, vector<32x128xf32>
    %4 = arith.truncf %3 : vector<32x128xf32> to vector<32x128xbf16>
    %c168 = arith.constant 168 : index
    %c0_3 = arith.constant 0 : index
    %5 = vector.load %arg1[%c168, %c0_3] : memref<208x128xf32, #tpu.memory_space<vmem>>, vector<32x128xf32>
    %6 = arith.truncf %5 : vector<32x128xf32> to vector<32x128xbf16>
    %c200 = arith.constant 200 : index
    %c0_4 = arith.constant 0 : index
    %7 = vector.load %arg1[%c200, %c0_4] : memref<208x128xf32, #tpu.memory_space<vmem>>, vector<1x128xf32>
    %c0_5 = arith.constant 0 : index
    %c0_6 = arith.constant 0 : index
    %8 = vector.load %arg0[%c0_5, %c0_6] : memref<64x1xi32, #tpu.memory_space<vmem>>, vector<64x1xi32>
    %9 = tpu.iota {dimensions = array<i32: 1>} : vector<64x128xi32>
    %10 = vector.broadcast %8 : vector<64x1xi32> to vector<64x128xi32>
    %11 = arith.cmpi eq, %9, %10 : vector<64x128xi32>
    %12 = arith.extui %11 : vector<64x128xi1> to vector<64x128xi32>
    %13 = arith.sitofp %12 : vector<64x128xi32> to vector<64x128xf32>
    %14 = arith.truncf %13 : vector<64x128xf32> to vector<64x128xbf16>
    %cst = arith.constant dense<0.000000e+00> : vector<64x128xf32>
    %15 = tpu.matmul %14, %1, %cst {dimension_numbers = #tpu.dot_dimension_numbers<[1], [0], [0], [1], [0, 0, 1, 1], [], []>} : vector<64x128xbf16>, vector<128x128xbf16>, vector<64x128xf32> -> vector<64x128xf32>
    %16 = vector.broadcast %2 : vector<1x128xf32> to vector<64x128xf32>
    %17 = arith.addf %15, %16 : vector<64x128xf32>
    %cst_7 = arith.constant 0.000000e+00 : f32
    %18 = vector.broadcast %cst_7 : f32 to vector<8x32xf32>
    %cst_8 = arith.constant 0.000000e+00 : f32
    %19 = vector.broadcast %cst_8 : f32 to vector<8x32xf32>
    %20 = vector.extract_strided_slice %17 {offsets = [0, 0], sizes = [8, 128], strides = [1, 1]} : vector<64x128xf32> to vector<8x128xf32>
    %21 = arith.truncf %18 : vector<8x32xf32> to vector<8x32xbf16>
    %cst_9 = arith.constant dense<0.000000e+00> : vector<8x128xf32>
    %22 = tpu.matmul %21, %4, %cst_9 {dimension_numbers = #tpu.dot_dimension_numbers<[1], [0], [0], [1], [0, 0, 1, 1], [], []>} : vector<8x32xbf16>, vector<32x128xbf16>, vector<8x128xf32> -> vector<8x128xf32>
    %23 = arith.addf %20, %22 : vector<8x128xf32>
    %24 = arith.negf %23 : vector<8x128xf32>
    %25 = math.exp %24 : vector<8x128xf32>
    %cst_10 = arith.constant 1.000000e+00 : f32
    %26 = vector.broadcast %cst_10 : f32 to vector<8x128xf32>
    %27 = arith.addf %26, %25 : vector<8x128xf32>
    %28 = arith.divf %26, %27 : vector<8x128xf32>
    %29 = math.tanh %23 : vector<8x128xf32>
    %30 = vector.extract_strided_slice %28 {offsets = [0, 0], sizes = [8, 32], strides = [1, 1]} : vector<8x128xf32> to vector<8x32xf32>
    %31 = vector.extract_strided_slice %28 {offsets = [0, 32], sizes = [8, 32], strides = [1, 1]} : vector<8x128xf32> to vector<8x32xf32>
    %32 = vector.extract_strided_slice %28 {offsets = [0, 64], sizes = [8, 32], strides = [1, 1]} : vector<8x128xf32> to vector<8x32xf32>
    %33 = vector.extract_strided_slice %29 {offsets = [0, 96], sizes = [8, 32], strides = [1, 1]} : vector<8x128xf32> to vector<8x32xf32>
    %34 = arith.mulf %31, %19 : vector<8x32xf32>
    %35 = arith.mulf %30, %33 : vector<8x32xf32>
    %36 = arith.addf %34, %35 : vector<8x32xf32>
    %37 = math.tanh %36 : vector<8x32xf32>
    %38 = arith.mulf %32, %37 : vector<8x32xf32>
    %39 = vector.extract_strided_slice %17 {offsets = [8, 0], sizes = [8, 128], strides = [1, 1]} : vector<64x128xf32> to vector<8x128xf32>
    %40 = arith.truncf %38 : vector<8x32xf32> to vector<8x32xbf16>
    %cst_11 = arith.constant dense<0.000000e+00> : vector<8x128xf32>
    %41 = tpu.matmul %40, %4, %cst_11 {dimension_numbers = #tpu.dot_dimension_numbers<[1], [0], [0], [1], [0, 0, 1, 1], [], []>} : vector<8x32xbf16>, vector<32x128xbf16>, vector<8x128xf32> -> vector<8x128xf32>
    %42 = arith.addf %39, %41 : vector<8x128xf32>
    %43 = arith.negf %42 : vector<8x128xf32>
    %44 = math.exp %43 : vector<8x128xf32>
    %cst_12 = arith.constant 1.000000e+00 : f32
    %45 = vector.broadcast %cst_12 : f32 to vector<8x128xf32>
    %46 = arith.addf %45, %44 : vector<8x128xf32>
    %47 = arith.divf %45, %46 : vector<8x128xf32>
    %48 = math.tanh %42 : vector<8x128xf32>
    %49 = vector.extract_strided_slice %47 {offsets = [0, 0], sizes = [8, 32], strides = [1, 1]} : vector<8x128xf32> to vector<8x32xf32>
    %50 = vector.extract_strided_slice %47 {offsets = [0, 32], sizes = [8, 32], strides = [1, 1]} : vector<8x128xf32> to vector<8x32xf32>
    %51 = vector.extract_strided_slice %47 {offsets = [0, 64], sizes = [8, 32], strides = [1, 1]} : vector<8x128xf32> to vector<8x32xf32>
    %52 = vector.extract_strided_slice %48 {offsets = [0, 96], sizes = [8, 32], strides = [1, 1]} : vector<8x128xf32> to vector<8x32xf32>
    %53 = arith.mulf %50, %36 : vector<8x32xf32>
    %54 = arith.mulf %49, %52 : vector<8x32xf32>
    %55 = arith.addf %53, %54 : vector<8x32xf32>
    %56 = math.tanh %55 : vector<8x32xf32>
    %57 = arith.mulf %51, %56 : vector<8x32xf32>
    %58 = vector.extract_strided_slice %17 {offsets = [16, 0], sizes = [8, 128], strides = [1, 1]} : vector<64x128xf32> to vector<8x128xf32>
    %59 = arith.truncf %57 : vector<8x32xf32> to vector<8x32xbf16>
    %cst_13 = arith.constant dense<0.000000e+00> : vector<8x128xf32>
    %60 = tpu.matmul %59, %4, %cst_13 {dimension_numbers = #tpu.dot_dimension_numbers<[1], [0], [0], [1], [0, 0, 1, 1], [], []>} : vector<8x32xbf16>, vector<32x128xbf16>, vector<8x128xf32> -> vector<8x128xf32>
    %61 = arith.addf %58, %60 : vector<8x128xf32>
    %62 = arith.negf %61 : vector<8x128xf32>
    %63 = math.exp %62 : vector<8x128xf32>
    %cst_14 = arith.constant 1.000000e+00 : f32
    %64 = vector.broadcast %cst_14 : f32 to vector<8x128xf32>
    %65 = arith.addf %64, %63 : vector<8x128xf32>
    %66 = arith.divf %64, %65 : vector<8x128xf32>
    %67 = math.tanh %61 : vector<8x128xf32>
    %68 = vector.extract_strided_slice %66 {offsets = [0, 0], sizes = [8, 32], strides = [1, 1]} : vector<8x128xf32> to vector<8x32xf32>
    %69 = vector.extract_strided_slice %66 {offsets = [0, 32], sizes = [8, 32], strides = [1, 1]} : vector<8x128xf32> to vector<8x32xf32>
    %70 = vector.extract_strided_slice %66 {offsets = [0, 64], sizes = [8, 32], strides = [1, 1]} : vector<8x128xf32> to vector<8x32xf32>
    %71 = vector.extract_strided_slice %67 {offsets = [0, 96], sizes = [8, 32], strides = [1, 1]} : vector<8x128xf32> to vector<8x32xf32>
    %72 = arith.mulf %69, %55 : vector<8x32xf32>
    %73 = arith.mulf %68, %71 : vector<8x32xf32>
    %74 = arith.addf %72, %73 : vector<8x32xf32>
    %75 = math.tanh %74 : vector<8x32xf32>
    %76 = arith.mulf %70, %75 : vector<8x32xf32>
    %77 = vector.extract_strided_slice %17 {offsets = [24, 0], sizes = [8, 128], strides = [1, 1]} : vector<64x128xf32> to vector<8x128xf32>
    %78 = arith.truncf %76 : vector<8x32xf32> to vector<8x32xbf16>
    %cst_15 = arith.constant dense<0.000000e+00> : vector<8x128xf32>
    %79 = tpu.matmul %78, %4, %cst_15 {dimension_numbers = #tpu.dot_dimension_numbers<[1], [0], [0], [1], [0, 0, 1, 1], [], []>} : vector<8x32xbf16>, vector<32x128xbf16>, vector<8x128xf32> -> vector<8x128xf32>
    %80 = arith.addf %77, %79 : vector<8x128xf32>
    %81 = arith.negf %80 : vector<8x128xf32>
    %82 = math.exp %81 : vector<8x128xf32>
    %cst_16 = arith.constant 1.000000e+00 : f32
    %83 = vector.broadcast %cst_16 : f32 to vector<8x128xf32>
    %84 = arith.addf %83, %82 : vector<8x128xf32>
    %85 = arith.divf %83, %84 : vector<8x128xf32>
    %86 = math.tanh %80 : vector<8x128xf32>
    %87 = vector.extract_strided_slice %85 {offsets = [0, 0], sizes = [8, 32], strides = [1, 1]} : vector<8x128xf32> to vector<8x32xf32>
    %88 = vector.extract_strided_slice %85 {offsets = [0, 32], sizes = [8, 32], strides = [1, 1]} : vector<8x128xf32> to vector<8x32xf32>
    %89 = vector.extract_strided_slice %85 {offsets = [0, 64], sizes = [8, 32], strides = [1, 1]} : vector<8x128xf32> to vector<8x32xf32>
    %90 = vector.extract_strided_slice %86 {offsets = [0, 96], sizes = [8, 32], strides = [1, 1]} : vector<8x128xf32> to vector<8x32xf32>
    %91 = arith.mulf %88, %74 : vector<8x32xf32>
    %92 = arith.mulf %87, %90 : vector<8x32xf32>
    %93 = arith.addf %91, %92 : vector<8x32xf32>
    %94 = math.tanh %93 : vector<8x32xf32>
    %95 = arith.mulf %89, %94 : vector<8x32xf32>
    %96 = vector.extract_strided_slice %17 {offsets = [32, 0], sizes = [8, 128], strides = [1, 1]} : vector<64x128xf32> to vector<8x128xf32>
    %97 = arith.truncf %95 : vector<8x32xf32> to vector<8x32xbf16>
    %cst_17 = arith.constant dense<0.000000e+00> : vector<8x128xf32>
    %98 = tpu.matmul %97, %4, %cst_17 {dimension_numbers = #tpu.dot_dimension_numbers<[1], [0], [0], [1], [0, 0, 1, 1], [], []>} : vector<8x32xbf16>, vector<32x128xbf16>, vector<8x128xf32> -> vector<8x128xf32>
    %99 = arith.addf %96, %98 : vector<8x128xf32>
    %100 = arith.negf %99 : vector<8x128xf32>
    %101 = math.exp %100 : vector<8x128xf32>
    %cst_18 = arith.constant 1.000000e+00 : f32
    %102 = vector.broadcast %cst_18 : f32 to vector<8x128xf32>
    %103 = arith.addf %102, %101 : vector<8x128xf32>
    %104 = arith.divf %102, %103 : vector<8x128xf32>
    %105 = math.tanh %99 : vector<8x128xf32>
    %106 = vector.extract_strided_slice %104 {offsets = [0, 0], sizes = [8, 32], strides = [1, 1]} : vector<8x128xf32> to vector<8x32xf32>
    %107 = vector.extract_strided_slice %104 {offsets = [0, 32], sizes = [8, 32], strides = [1, 1]} : vector<8x128xf32> to vector<8x32xf32>
    %108 = vector.extract_strided_slice %104 {offsets = [0, 64], sizes = [8, 32], strides = [1, 1]} : vector<8x128xf32> to vector<8x32xf32>
    %109 = vector.extract_strided_slice %105 {offsets = [0, 96], sizes = [8, 32], strides = [1, 1]} : vector<8x128xf32> to vector<8x32xf32>
    %110 = arith.mulf %107, %93 : vector<8x32xf32>
    %111 = arith.mulf %106, %109 : vector<8x32xf32>
    %112 = arith.addf %110, %111 : vector<8x32xf32>
    %113 = math.tanh %112 : vector<8x32xf32>
    %114 = arith.mulf %108, %113 : vector<8x32xf32>
    %115 = vector.extract_strided_slice %17 {offsets = [40, 0], sizes = [8, 128], strides = [1, 1]} : vector<64x128xf32> to vector<8x128xf32>
    %116 = arith.truncf %114 : vector<8x32xf32> to vector<8x32xbf16>
    %cst_19 = arith.constant dense<0.000000e+00> : vector<8x128xf32>
    %117 = tpu.matmul %116, %4, %cst_19 {dimension_numbers = #tpu.dot_dimension_numbers<[1], [0], [0], [1], [0, 0, 1, 1], [], []>} : vector<8x32xbf16>, vector<32x128xbf16>, vector<8x128xf32> -> vector<8x128xf32>
    %118 = arith.addf %115, %117 : vector<8x128xf32>
    %119 = arith.negf %118 : vector<8x128xf32>
    %120 = math.exp %119 : vector<8x128xf32>
    %cst_20 = arith.constant 1.000000e+00 : f32
    %121 = vector.broadcast %cst_20 : f32 to vector<8x128xf32>
    %122 = arith.addf %121, %120 : vector<8x128xf32>
    %123 = arith.divf %121, %122 : vector<8x128xf32>
    %124 = math.tanh %118 : vector<8x128xf32>
    %125 = vector.extract_strided_slice %123 {offsets = [0, 0], sizes = [8, 32], strides = [1, 1]} : vector<8x128xf32> to vector<8x32xf32>
    %126 = vector.extract_strided_slice %123 {offsets = [0, 32], sizes = [8, 32], strides = [1, 1]} : vector<8x128xf32> to vector<8x32xf32>
    %127 = vector.extract_strided_slice %123 {offsets = [0, 64], sizes = [8, 32], strides = [1, 1]} : vector<8x128xf32> to vector<8x32xf32>
    %128 = vector.extract_strided_slice %124 {offsets = [0, 96], sizes = [8, 32], strides = [1, 1]} : vector<8x128xf32> to vector<8x32xf32>
    %129 = arith.mulf %126, %112 : vector<8x32xf32>
    %130 = arith.mulf %125, %128 : vector<8x32xf32>
    %131 = arith.addf %129, %130 : vector<8x32xf32>
    %132 = math.tanh %131 : vector<8x32xf32>
    %133 = arith.mulf %127, %132 : vector<8x32xf32>
    %134 = vector.extract_strided_slice %17 {offsets = [48, 0], sizes = [8, 128], strides = [1, 1]} : vector<64x128xf32> to vector<8x128xf32>
    %135 = arith.truncf %133 : vector<8x32xf32> to vector<8x32xbf16>
    %cst_21 = arith.constant dense<0.000000e+00> : vector<8x128xf32>
    %136 = tpu.matmul %135, %4, %cst_21 {dimension_numbers = #tpu.dot_dimension_numbers<[1], [0], [0], [1], [0, 0, 1, 1], [], []>} : vector<8x32xbf16>, vector<32x128xbf16>, vector<8x128xf32> -> vector<8x128xf32>
    %137 = arith.addf %134, %136 : vector<8x128xf32>
    %138 = arith.negf %137 : vector<8x128xf32>
    %139 = math.exp %138 : vector<8x128xf32>
    %cst_22 = arith.constant 1.000000e+00 : f32
    %140 = vector.broadcast %cst_22 : f32 to vector<8x128xf32>
    %141 = arith.addf %140, %139 : vector<8x128xf32>
    %142 = arith.divf %140, %141 : vector<8x128xf32>
    %143 = math.tanh %137 : vector<8x128xf32>
    %144 = vector.extract_strided_slice %142 {offsets = [0, 0], sizes = [8, 32], strides = [1, 1]} : vector<8x128xf32> to vector<8x32xf32>
    %145 = vector.extract_strided_slice %142 {offsets = [0, 32], sizes = [8, 32], strides = [1, 1]} : vector<8x128xf32> to vector<8x32xf32>
    %146 = vector.extract_strided_slice %142 {offsets = [0, 64], sizes = [8, 32], strides = [1, 1]} : vector<8x128xf32> to vector<8x32xf32>
    %147 = vector.extract_strided_slice %143 {offsets = [0, 96], sizes = [8, 32], strides = [1, 1]} : vector<8x128xf32> to vector<8x32xf32>
    %148 = arith.mulf %145, %131 : vector<8x32xf32>
    %149 = arith.mulf %144, %147 : vector<8x32xf32>
    %150 = arith.addf %148, %149 : vector<8x32xf32>
    %151 = math.tanh %150 : vector<8x32xf32>
    %152 = arith.mulf %146, %151 : vector<8x32xf32>
    %153 = vector.extract_strided_slice %17 {offsets = [56, 0], sizes = [8, 128], strides = [1, 1]} : vector<64x128xf32> to vector<8x128xf32>
    %154 = arith.truncf %152 : vector<8x32xf32> to vector<8x32xbf16>
    %cst_23 = arith.constant dense<0.000000e+00> : vector<8x128xf32>
    %155 = tpu.matmul %154, %4, %cst_23 {dimension_numbers = #tpu.dot_dimension_numbers<[1], [0], [0], [1], [0, 0, 1, 1], [], []>} : vector<8x32xbf16>, vector<32x128xbf16>, vector<8x128xf32> -> vector<8x128xf32>
    %156 = arith.addf %153, %155 : vector<8x128xf32>
    %157 = arith.negf %156 : vector<8x128xf32>
    %158 = math.exp %157 : vector<8x128xf32>
    %cst_24 = arith.constant 1.000000e+00 : f32
    %159 = vector.broadcast %cst_24 : f32 to vector<8x128xf32>
    %160 = arith.addf %159, %158 : vector<8x128xf32>
    %161 = arith.divf %159, %160 : vector<8x128xf32>
    %162 = math.tanh %156 : vector<8x128xf32>
    %163 = vector.extract_strided_slice %161 {offsets = [0, 0], sizes = [8, 32], strides = [1, 1]} : vector<8x128xf32> to vector<8x32xf32>
    %164 = vector.extract_strided_slice %161 {offsets = [0, 32], sizes = [8, 32], strides = [1, 1]} : vector<8x128xf32> to vector<8x32xf32>
    %165 = vector.extract_strided_slice %161 {offsets = [0, 64], sizes = [8, 32], strides = [1, 1]} : vector<8x128xf32> to vector<8x32xf32>
    %166 = vector.extract_strided_slice %162 {offsets = [0, 96], sizes = [8, 32], strides = [1, 1]} : vector<8x128xf32> to vector<8x32xf32>
    %167 = arith.mulf %164, %150 : vector<8x32xf32>
    %168 = arith.mulf %163, %166 : vector<8x32xf32>
    %169 = arith.addf %167, %168 : vector<8x32xf32>
    %170 = math.tanh %169 : vector<8x32xf32>
    %171 = arith.mulf %165, %170 : vector<8x32xf32>
    %172 = arith.truncf %171 : vector<8x32xf32> to vector<8x32xbf16>
    %cst_25 = arith.constant dense<0.000000e+00> : vector<8x128xf32>
    %173 = tpu.matmul %172, %6, %cst_25 {dimension_numbers = #tpu.dot_dimension_numbers<[1], [0], [0], [1], [0, 0, 1, 1], [], []>} : vector<8x32xbf16>, vector<32x128xbf16>, vector<8x128xf32> -> vector<8x128xf32>
    %174 = vector.broadcast %7 : vector<1x128xf32> to vector<8x128xf32>
    %175 = arith.addf %173, %174 : vector<8x128xf32>
    %c0_26 = arith.constant 0 : index
    %c0_27 = arith.constant 0 : index
    %176 = vector.load %arg2[%c0_26, %c0_27] : memref<8x128xf32, #tpu.memory_space<vmem>>, vector<8x128xf32>
    tpu.vector_store %arg2[%c0_26, %c0_27], %175 {strides = array<i32>} : memref<8x128xf32, #tpu.memory_space<vmem>>, vector<8x128xf32>,
    return
  }
}

</mosaic_0001>

<llo_original>
// kernel: tpu_custom_call.1
$region0: #{tpu_custom_call.1}
  #allocation0 [shape = 'u32[]', space=smem, size = 0x4, offset = 0x4, fixed_abs, tag = 'smem constant byte address 0x4 - core index']
  #allocation1 [shape = 'u32[72,128]{1,0:T(1,128)}', space=vmem, size = 0x9000, scoped, tag = 'internal scratch']
  %s0 = inlined_call_operand.vmem [shape: s32[64,1], index: 0, kind: input, shape index: {}]
  %s1 = inlined_call_operand.hbm [shape: f32[208,128], index: 1, kind: input, shape index: {}]
  %s2 = inlined_call_operand.hbm [shape: f32[8,128], index: 2, kind: output, shape index: {}]
  %s3 = sld [smem:[#allocation0]]
  $region22: #{tpu_custom_call.1} parent=0
    _
  %s5 = ssub.s32 1, %s3
  %s6 = scalar_select 0, %s5, %s3
  $region1: #{tpu_custom_call.1} parent=0
    #allocation2 [shape = 'u8[106496]{0}', space=vmem, size = 0x1a000, scoped, tag = 'input window, operand 1, single buffered']
    #allocation3 [shape = 's32[1]{0}', space=sflag, size = 0x4, scoped, tag = 'scoped memory for tpu_custom_call.1']
    #allocation4 [shape = 's32[1]{0}', space=sflag, size = 0x4, scoped, tag = 'scoped memory for tpu_custom_call.1']
    #allocation5 [shape = 'u8[4096]{0}', space=vmem, size = 0x1000, scoped, tag = 'output window, operand 0, single buffered']
    %7 = vsyncpa [#allocation3], 0
    %8 = vsyncpa [#allocation4], 0
    // Predicated region
    $region2: #{tpu_custom_call.1} parent=1 // pred_check
      _
    $region3: #{tpu_custom_call.1} parent=1 // pred_check_branch
      %10 = sbr.rel (0) target = $region5
    $region4: #{tpu_custom_call.1} parent=1 // pred_region
      _
    $region5: #{tpu_custom_call.1} parent=1 // pred_fallthru
      _
    // Predicated region
    $region6: #{tpu_custom_call.1} parent=1 // pred_check
      _
    $region7: #{tpu_custom_call.1} parent=1 // pred_check_branch
      %12 = sbr.rel (0) target = $region9
    $region8: #{tpu_custom_call.1} parent=1 // pred_region
      %14 = vsyncadd [#allocation3], 0
      %s15 = sshll.u32 %s1, 4
      %s16 = int_to_ptr.hbm [resolvable:$true] %s15
      %s17 = sshll.u32 [#allocation2], 4
      %s18 = int_to_ptr.vmem [resolvable:$true] %s17
      %23 = dma.hbm_to_vmem [thread:$0]  %s16, 3328, %s18, [#allocation3], 128, 128, 8
    $region9: #{tpu_custom_call.1} parent=1 // pred_fallthru
      _
    // Predicated region
    $region10: #{tpu_custom_call.1} parent=1 // pred_check
      _
    $region11: #{tpu_custom_call.1} parent=1 // pred_check_branch
      %25 = sbr.rel (0) target = $region13
    $region12: #{tpu_custom_call.1} parent=1 // pred_region
      %27 = dma.done [#allocation3], 3328
    $region13: #{tpu_custom_call.1} parent=1 // pred_fallthru
      _
    %v29 = vld [vmem:[#allocation2] sm:$0xff]
    %v30 = vld [vmem:[#allocation2 + $0x8] sm:$0xff]
    %v31 = vld [vmem:[#allocation2 + $0x10] sm:$0xff]
    %v32 = vld [vmem:[#allocation2 + $0x18] sm:$0xff]
    %v33 = vld [vmem:[#allocation2 + $0x20] sm:$0xff]
    %v34 = vld [vmem:[#allocation2 + $0x28] sm:$0xff]
    %v35 = vld [vmem:[#allocation2 + $0x30] sm:$0xff]
    %v36 = vld [vmem:[#allocation2 + $0x38] sm:$0xff]
    %v37 = vld [vmem:[#allocation2 + $0x40] sm:$0xff]
    %v38 = vld [vmem:[#allocation2 + $0x48] sm:$0xff]
    %v39 = vld [vmem:[#allocation2 + $0x50] sm:$0xff]
    %v40 = vld [vmem:[#allocation2 + $0x58] sm:$0xff]
    %v41 = vld [vmem:[#allocation2 + $0x60] sm:$0xff]
    %v42 = vld [vmem:[#allocation2 + $0x68] sm:$0xff]
    %v43 = vld [vmem:[#allocation2 + $0x70] sm:$0xff]
    %v44 = vld [vmem:[#allocation2 + $0x78] sm:$0xff]
    %v45 = vpack.c.bf16 %v30, %v29
    %v46 = vpack.c.bf16 %v32, %v31
    %v47 = vpack.c.bf16 %v34, %v33
    %v48 = vpack.c.bf16 %v36, %v35
    %v49 = vpack.c.bf16 %v38, %v37
    %v50 = vpack.c.bf16 %v40, %v39
    %v51 = vpack.c.bf16 %v42, %v41
    %v52 = vpack.c.bf16 %v44, %v43
    %v53 = vld [vmem:[#allocation2 + $0x80] sm:$0x1]
    %v54 = vld [vmem:[#allocation2 + $0x88] sm:$0xff]
    %v55 = vld [vmem:[#allocation2 + $0x90] sm:$0xff]
    %v56 = vld [vmem:[#allocation2 + $0x98] sm:$0xff]
    %v57 = vld [vmem:[#allocation2 + $0xa0] sm:$0xff]
    %v58 = vpack.c.bf16 %v55, %v54
    %v59 = vpack.c.bf16 %v57, %v56
    %v60 = vld [vmem:[#allocation2 + $0xa8] sm:$0xff]
    %v61 = vld [vmem:[#allocation2 + $0xb0] sm:$0xff]
    %v62 = vld [vmem:[#allocation2 + $0xb8] sm:$0xff]
    %v63 = vld [vmem:[#allocation2 + $0xc0] sm:$0xff]
    %v64 = vpack.c.bf16 %v61, %v60
    %v65 = vpack.c.bf16 %v63, %v62
    %v66 = vld [vmem:[#allocation2 + $0xc8] sm:$0x1]
    %v67 = vld [vmem:[%s0] sm:$0xff]
    %v68 = vld [vmem:[%s0 + $0x8] sm:$0xff]
    %v69 = vld [vmem:[%s0 + $0x10] sm:$0xff]
    %v70 = vld [vmem:[%s0 + $0x18] sm:$0xff]
    %v71 = vld [vmem:[%s0 + $0x20] sm:$0xff]
    %v72 = vld [vmem:[%s0 + $0x28] sm:$0xff]
    %v73 = vld [vmem:[%s0 + $0x30] sm:$0xff]
    %v74 = vld [vmem:[%s0 + $0x38] sm:$0xff]
    %v75 = vlaneseq
    %v76 = vand.u32 %v75, 127
    %77 = vset.pattern.permute.xlu0 0
    %78 = vperm.xlu0 %77, %v67
    %v79 = vpop.permute.xlu0 %78
    %80 = vset.pattern.permute.xlu0 0
    %81 = vperm.xlu0 %80, %v68
    %v82 = vpop.permute.xlu0 %81
    %83 = vset.pattern.permute.xlu0 0
    %84 = vperm.xlu0 %83, %v69
    %v85 = vpop.permute.xlu0 %84
    %86 = vset.pattern.permute.xlu0 0
    %87 = vperm.xlu0 %86, %v70
    %v88 = vpop.permute.xlu0 %87
    %89 = vset.pattern.permute.xlu0 0
    %90 = vperm.xlu0 %89, %v71
    %v91 = vpop.permute.xlu0 %90
    %92 = vset.pattern.permute.xlu0 0
    %93 = vperm.xlu0 %92, %v72
    %v94 = vpop.permute.xlu0 %93
    %95 = vset.pattern.permute.xlu0 0
    %96 = vperm.xlu0 %95, %v73
    %v97 = vpop.permute.xlu0 %96
    %98 = vset.pattern.permute.xlu0 0
    %99 = vperm.xlu0 %98, %v74
    %v100 = vpop.permute.xlu0 %99
    %vm101 = vcmp.eq.s32.totalorder %v76, %v79
    %vm102 = vcmp.eq.s32.totalorder %v76, %v82
    %vm103 = vcmp.eq.s32.totalorder %v76, %v85
    %vm104 = vcmp.eq.s32.totalorder %v76, %v88
    %vm105 = vcmp.eq.s32.totalorder %v76, %v91
    %vm106 = vcmp.eq.s32.totalorder %v76, %v94
    %vm107 = vcmp.eq.s32.totalorder %v76, %v97
    %vm108 = vcmp.eq.s32.totalorder %v76, %v100
    %v109 = vsel %vm101, 1, 0
    %v110 = vsel %vm102, 1, 0
    %v111 = vsel %vm103, 1, 0
    %v112 = vsel %vm104, 1, 0
    %v113 = vsel %vm105, 1, 0
    %v114 = vsel %vm106, 1, 0
    %v115 = vsel %vm107, 1, 0
    %v116 = vsel %vm108, 1, 0
    %v117 = vcvt.s32.f32 %v109
    %v118 = vcvt.s32.f32 %v110
    %v119 = vcvt.s32.f32 %v111
    %v120 = vcvt.s32.f32 %v112
    %v121 = vcvt.s32.f32 %v113
    %v122 = vcvt.s32.f32 %v114
    %v123 = vcvt.s32.f32 %v115
    %v124 = vcvt.s32.f32 %v116
    %v125 = vpack.c.bf16 %v118, %v117
    %v126 = vpack.c.bf16 %v120, %v119
    %v127 = vpack.c.bf16 %v122, %v121
    %v128 = vpack.c.bf16 %v124, %v123
    %v129 = vperm.slane %v53, 0
    %130 = vmatpush.bf16.msra.mxu0 %v52
    %131 = vmatpush.bf16.msra.mxu0 %v51
    %132 = vmatpush.bf16.msra.mxu0 %v50
    %133 = vmatpush.bf16.msra.mxu0 %v49
    %134 = vmatpush.bf16.msra.mxu0 %v48
    %135 = vmatpush.bf16.msra.mxu0 %v47
    %136 = vmatpush.bf16.msra.mxu0 %v46
    %137 = vmatpush.bf16.msra.mxu0 %v45
    %138 = vmatmul.bf16.gmra.mxu0 %v125
    %v139 = vpop.f32.mrf.mxu0
    %v140 = vadd.f32 %v129, %v139
    %v141 = vpop.f32.mrf.mxu0
    %v142 = vadd.f32 %v129, %v141
    %143 = vmatmul.bf16.gmra.mxu0 %v126
    %v144 = vpop.f32.mrf.mxu0
    %v145 = vadd.f32 %v129, %v144
    %v146 = vpop.f32.mrf.mxu0
    %v147 = vadd.f32 %v129, %v146
    %148 = vmatmul.bf16.gmra.mxu0 %v127
    %v149 = vpop.f32.mrf.mxu0
    %v150 = vadd.f32 %v129, %v149
    %v151 = vpop.f32.mrf.mxu0
    %v152 = vadd.f32 %v129, %v151
    %153 = vmatmul.bf16.gmra.mxu0 %v128
    %v154 = vpop.f32.mrf.mxu0
    %v155 = vadd.f32 %v129, %v154
    %v156 = vpop.f32.mrf.mxu0
    %v157 = vadd.f32 %v129, %v156
    %158 = vdwg.mxu0
    %vm159 = vcmask 261120
    %v161 = vsel %vm159, 0, 0
    %163 = vmatpush.bf16.msra.mxu0 0
    %164 = vmatpush.bf16.msra.mxu0 0
    %165 = vmatpush.bf16.msra.mxu0 0
    %166 = vmatpush.bf16.msra.mxu0 0
    %167 = vmatpush.bf16.msra.mxu0 0
    %168 = vmatpush.bf16.msra.mxu0 0
    %169 = vmatpush.bf16.msra.mxu0 %v59
    %170 = vmatpush.bf16.msra.mxu0 %v58
    %171 = vmatmul.bf16.gmra.mxu0 %v161
    %v172 = vpop.f32.mrf.mxu0
    %v173 = vadd.f32 0.0, %v172
    %v174 = vpop.f32.mrf.mxu0
    %175 = vdwg.mxu0
    %v176 = vadd.f32 %v140, %v173
    %v177 = vxor.u32 %v176, 2147483648
    %v178 = vmul.f32 %v177, 1.442695
    %v179 = vpow.pop %v178
    %v180 = vadd.f32 %v179, 1.0
    %v181 = vrcp.pop %v180
    %v182 = vmul.f32 %v180, %v181
    %v183 = vsub.f32 1.0, %v182
    %v184 = vmul.f32 %v181, %v183
    %v185 = vadd.f32 %v181, %v184
    %vm186 = vweird.f32 %v180
    %vm187 = vweird.f32 %v181
    %vm188 = vmor %vm186, %vm187
    %v189 = vsel %vm188, %v181, %v185
    %v190 = vand.u32 2147483647, %v180
    %vm191 = vcmp.eq.f32.partialorder %v190, 8.507059e+37
    %v192 = vand.u32 %v180, 2147483648
    %v193 = vor.u32 1.1754944e-38, %v192
    %v194 = vsel %vm191, %v193, %v189
    %v195 = vmul.f32 1.0, %v194
    %v196 = vtanh.pop %v176
    %v197 = vmul.f32 %v195, 0.0
    %199 = vrot.lane.b32.xlu0 %v196, 32
    %v200 = vpop.permute.xlu0 %199
    %v202 = vmul.f32 %v195, %v200
    %204 = vrot.lane.b32.xlu0 %v202, 32
    %v205 = vpop.permute.xlu0 %204
    %v207 = vadd.f32 %v197, %v205
    %v208 = vtanh.pop %v207
    %210 = vrot.lane.b32.xlu0 %v208, 32
    %v211 = vpop.permute.xlu0 %210
    %v213 = vmul.f32 %v195, %v211
    %v214 = vpack.c.bf16 %v213, %v213
    %216 = vrot.lane.b32.xlu0 %v214, 64
    %v217 = vpop.permute.xlu0 %216
    %v219 = vsel %vm159, %v217, 0
    %221 = vmatpush.bf16.msra.mxu0 0
    %222 = vmatpush.bf16.msra.mxu0 0
    %223 = vmatpush.bf16.msra.mxu0 0
    %224 = vmatpush.bf16.msra.mxu0 0
    %225 = vmatpush.bf16.msra.mxu0 0
    %226 = vmatpush.bf16.msra.mxu0 0
    %227 = vmatpush.bf16.msra.mxu0 %v59
    %228 = vmatpush.bf16.msra.mxu0 %v58
    %229 = vmatmul.bf16.gmra.mxu0 %v219
    %v230 = vpop.f32.mrf.mxu0
    %v231 = vadd.f32 0.0, %v230
    %v232 = vpop.f32.mrf.mxu0
    %233 = vdwg.mxu0
    %v234 = vadd.f32 %v142, %v231
    %v235 = vxor.u32 %v234, 2147483648
    %v236 = vmul.f32 %v235, 1.442695
    %v237 = vpow.pop %v236
    %v238 = vadd.f32 %v237, 1.0
    %v239 = vrcp.pop %v238
    %v240 = vmul.f32 %v238, %v239
    %v241 = vsub.f32 1.0, %v240
    %v242 = vmul.f32 %v239, %v241
    %v243 = vadd.f32 %v239, %v242
    %vm244 = vweird.f32 %v238
    %vm245 = vweird.f32 %v239
    %vm246 = vmor %vm244, %vm245
    %v247 = vsel %vm246, %v239, %v243
    %v248 = vand.u32 2147483647, %v238
    %vm249 = vcmp.eq.f32.partialorder %v248, 8.507059e+37
    %v250 = vand.u32 %v238, 2147483648
    %v251 = vor.u32 1.1754944e-38, %v250
    %v252 = vsel %vm249, %v251, %v247
    %v253 = vmul.f32 1.0, %v252
    %v254 = vtanh.pop %v234
    %v255 = vmul.f32 %v253, %v207
    %257 = vrot.lane.b32.xlu0 %v254, 32
    %v258 = vpop.permute.xlu0 %257
    %v260 = vmul.f32 %v253, %v258
    %262 = vrot.lane.b32.xlu0 %v260, 32
    %v263 = vpop.permute.xlu0 %262
    %v265 = vadd.f32 %v255, %v263
    %v266 = vtanh.pop %v265
    %268 = vrot.lane.b32.xlu0 %v266, 32
    %v269 = vpop.permute.xlu0 %268
    %v271 = vmul.f32 %v253, %v269
    %v272 = vpack.c.bf16 %v271, %v271
    %274 = vrot.lane.b32.xlu0 %v272, 64
    %v275 = vpop.permute.xlu0 %274
    %v277 = vsel %vm159, %v275, 0
    %279 = vmatpush.bf16.msra.mxu0 0
    %280 = vmatpush.bf16.msra.mxu0 0
    %281 = vmatpush.bf16.msra.mxu0 0
    %282 = vmatpush.bf16.msra.mxu0 0
    %283 = vmatpush.bf16.msra.mxu0 0
    %284 = vmatpush.bf16.msra.mxu0 0
    %285 = vmatpush.bf16.msra.mxu0 %v59
    %286 = vmatpush.bf16.msra.mxu0 %v58
    %287 = vmatmul.bf16.gmra.mxu0 %v277
    %v288 = vpop.f32.mrf.mxu0
    %v289 = vadd.f32 0.0, %v288
    %v290 = vpop.f32.mrf.mxu0
    %291 = vdwg.mxu0
    %v292 = vadd.f32 %v145, %v289
    %v293 = vxor.u32 %v292, 2147483648
    %v294 = vmul.f32 %v293, 1.442695
    %v295 = vpow.pop %v294
    %v296 = vadd.f32 %v295, 1.0
    %v297 = vrcp.pop %v296
    %v298 = vmul.f32 %v296, %v297
    %v299 = vsub.f32 1.0, %v298
    %v300 = vmul.f32 %v297, %v299
    %v301 = vadd.f32 %v297, %v300
    %vm302 = vweird.f32 %v296
    %vm303 = vweird.f32 %v297
    %vm304 = vmor %vm302, %vm303
    %v305 = vsel %vm304, %v297, %v301
    %v306 = vand.u32 2147483647, %v296
    %vm307 = vcmp.eq.f32.partialorder %v306, 8.507059e+37
    %v308 = vand.u32 %v296, 2147483648
    %v309 = vor.u32 1.1754944e-38, %v308
    %v310 = vsel %vm307, %v309, %v305
    %v311 = vmul.f32 1.0, %v310
    %v312 = vtanh.pop %v292
    %v313 = vmul.f32 %v311, %v265
    %315 = vrot.lane.b32.xlu0 %v312, 32
    %v316 = vpop.permute.xlu0 %315
    %v318 = vmul.f32 %v311, %v316
    %320 = vrot.lane.b32.xlu0 %v318, 32
    %v321 = vpop.permute.xlu0 %320
    %v323 = vadd.f32 %v313, %v321
    %v324 = vtanh.pop %v323
    %326 = vrot.lane.b32.xlu0 %v324, 32
    %v327 = vpop.permute.xlu0 %326
    %v329 = vmul.f32 %v311, %v327
    %v330 = vpack.c.bf16 %v329, %v329
    %332 = vrot.lane.b32.xlu0 %v330, 64
    %v333 = vpop.permute.xlu0 %332
    %v335 = vsel %vm159, %v333, 0
    %337 = vmatpush.bf16.msra.mxu0 0
    %338 = vmatpush.bf16.msra.mxu0 0
    %339 = vmatpush.bf16.msra.mxu0 0
    %340 = vmatpush.bf16.msra.mxu0 0
    %341 = vmatpush.bf16.msra.mxu0 0
    %342 = vmatpush.bf16.msra.mxu0 0
    %343 = vmatpush.bf16.msra.mxu0 %v59
    %344 = vmatpush.bf16.msra.mxu0 %v58
    %345 = vmatmul.bf16.gmra.mxu0 %v335
    %v346 = vpop.f32.mrf.mxu0
    %v347 = vadd.f32 0.0, %v346
    %v348 = vpop.f32.mrf.mxu0
    %349 = vdwg.mxu0
    %v350 = vadd.f32 %v147, %v347
    %v351 = vxor.u32 %v350, 2147483648
    %v352 = vmul.f32 %v351, 1.442695
    %v353 = vpow.pop %v352
    %v354 = vadd.f32 %v353, 1.0
    %v355 = vrcp.pop %v354
    %v356 = vmul.f32 %v354, %v355
    %v357 = vsub.f32 1.0, %v356
    %v358 = vmul.f32 %v355, %v357
    %v359 = vadd.f32 %v355, %v358
    %vm360 = vweird.f32 %v354
    %vm361 = vweird.f32 %v355
    %vm362 = vmor %vm360, %vm361
    %v363 = vsel %vm362, %v355, %v359
    %v364 = vand.u32 2147483647, %v354
    %vm365 = vcmp.eq.f32.partialorder %v364, 8.507059e+37
    %v366 = vand.u32 %v354, 2147483648
    %v367 = vor.u32 1.1754944e-38, %v366
    %v368 = vsel %vm365, %v367, %v363
    %v369 = vmul.f32 1.0, %v368
    %v370 = vtanh.pop %v350
    %v371 = vmul.f32 %v369, %v323
    %373 = vrot.lane.b32.xlu0 %v370, 32
    %v374 = vpop.permute.xlu0 %373
    %v376 = vmul.f32 %v369, %v374
    %378 = vrot.lane.b32.xlu0 %v376, 32
    %v379 = vpop.permute.xlu0 %378
    %v381 = vadd.f32 %v371, %v379
    %v382 = vtanh.pop %v381
    %384 = vrot.lane.b32.xlu0 %v382, 32
    %v385 = vpop.permute.xlu0 %384
    %v387 = vmul.f32 %v369, %v385
    %v388 = vpack.c.bf16 %v387, %v387
    %390 = vrot.lane.b32.xlu0 %v388, 64
    %v391 = vpop.permute.xlu0 %390
    %v393 = vsel %vm159, %v391, 0
    %395 = vmatpush.bf16.msra.mxu0 0
    %396 = vmatpush.bf16.msra.mxu0 0
    %397 = vmatpush.bf16.msra.mxu0 0
    %398 = vmatpush.bf16.msra.mxu0 0
    %399 = vmatpush.bf16.msra.mxu0 0
    %400 = vmatpush.bf16.msra.mxu0 0
    %401 = vmatpush.bf16.msra.mxu0 %v59
    %402 = vmatpush.bf16.msra.mxu0 %v58
    %403 = vmatmul.bf16.gmra.mxu0 %v393
    %v404 = vpop.f32.mrf.mxu0
    %v405 = vadd.f32 0.0, %v404
    %v406 = vpop.f32.mrf.mxu0
    %407 = vdwg.mxu0
    %v408 = vadd.f32 %v150, %v405
    %v409 = vxor.u32 %v408, 2147483648
    %v410 = vmul.f32 %v409, 1.442695
    %v411 = vpow.pop %v410
    %v412 = vadd.f32 %v411, 1.0
    %v413 = vrcp.pop %v412
    %v414 = vmul.f32 %v412, %v413
    %v415 = vsub.f32 1.0, %v414
    %v416 = vmul.f32 %v413, %v415
    %v417 = vadd.f32 %v413, %v416
    %vm418 = vweird.f32 %v412
    %vm419 = vweird.f32 %v413
    %vm420 = vmor %vm418, %vm419
    %v421 = vsel %vm420, %v413, %v417
    %v422 = vand.u32 2147483647, %v412
    %vm423 = vcmp.eq.f32.partialorder %v422, 8.507059e+37
    %v424 = vand.u32 %v412, 2147483648
    %v425 = vor.u32 1.1754944e-38, %v424
    %v426 = vsel %vm423, %v425, %v421
    %v427 = vmul.f32 1.0, %v426
    %v428 = vtanh.pop %v408
    %v429 = vmul.f32 %v427, %v381
    %431 = vrot.lane.b32.xlu0 %v428, 32
    %v432 = vpop.permute.xlu0 %431
    %v434 = vmul.f32 %v427, %v432
    %436 = vrot.lane.b32.xlu0 %v434, 32
    %v437 = vpop.permute.xlu0 %436
    %v439 = vadd.f32 %v429, %v437
    %v440 = vtanh.pop %v439
    %442 = vrot.lane.b32.xlu0 %v440, 32
    %v443 = vpop.permute.xlu0 %442
    %v445 = vmul.f32 %v427, %v443
    %v446 = vpack.c.bf16 %v445, %v445
    %448 = vrot.lane.b32.xlu0 %v446, 64
    %v449 = vpop.permute.xlu0 %448
    %v451 = vsel %vm159, %v449, 0
    %453 = vmatpush.bf16.msra.mxu0 0
    %454 = vmatpush.bf16.msra.mxu0 0
    %455 = vmatpush.bf16.msra.mxu0 0
    %456 = vmatpush.bf16.msra.mxu0 0
    %457 = vmatpush.bf16.msra.mxu0 0
    %458 = vmatpush.bf16.msra.mxu0 0
    %459 = vmatpush.bf16.msra.mxu0 %v59
    %460 = vmatpush.bf16.msra.mxu0 %v58
    %461 = vmatmul.bf16.gmra.mxu0 %v451
    %v462 = vpop.f32.mrf.mxu0
    %v463 = vadd.f32 0.0, %v462
    %v464 = vpop.f32.mrf.mxu0
    %465 = vdwg.mxu0
    %v466 = vadd.f32 %v152, %v463
    %v467 = vxor.u32 %v466, 2147483648
    %v468 = vmul.f32 %v467, 1.442695
    %v469 = vpow.pop %v468
    %v470 = vadd.f32 %v469, 1.0
    %v471 = vrcp.pop %v470
    %v472 = vmul.f32 %v470, %v471
    %v473 = vsub.f32 1.0, %v472
    %v474 = vmul.f32 %v471, %v473
    %v475 = vadd.f32 %v471, %v474
    %vm476 = vweird.f32 %v470
    %vm477 = vweird.f32 %v471
    %vm478 = vmor %vm476, %vm477
    %v479 = vsel %vm478, %v471, %v475
    %v480 = vand.u32 2147483647, %v470
    %vm481 = vcmp.eq.f32.partialorder %v480, 8.507059e+37
    %v482 = vand.u32 %v470, 2147483648
    %v483 = vor.u32 1.1754944e-38, %v482
    %v484 = vsel %vm481, %v483, %v479
    %v485 = vmul.f32 1.0, %v484
    %v486 = vtanh.pop %v466
    %v487 = vmul.f32 %v485, %v439
    %489 = vrot.lane.b32.xlu0 %v486, 32
    %v490 = vpop.permute.xlu0 %489
    %v492 = vmul.f32 %v485, %v490
    %494 = vrot.lane.b32.xlu0 %v492, 32
    %v495 = vpop.permute.xlu0 %494
    %v497 = vadd.f32 %v487, %v495
    %v498 = vtanh.pop %v497
    %500 = vrot.lane.b32.xlu0 %v498, 32
    %v501 = vpop.permute.xlu0 %500
    %v503 = vmul.f32 %v485, %v501
    %v504 = vpack.c.bf16 %v503, %v503
    %506 = vrot.lane.b32.xlu0 %v504, 64
    %v507 = vpop.permute.xlu0 %506
    %v509 = vsel %vm159, %v507, 0
    %511 = vmatpush.bf16.msra.mxu0 0
    %512 = vmatpush.bf16.msra.mxu0 0
    %513 = vmatpush.bf16.msra.mxu0 0
    %514 = vmatpush.bf16.msra.mxu0 0
    %515 = vmatpush.bf16.msra.mxu0 0
    %516 = vmatpush.bf16.msra.mxu0 0
    %517 = vmatpush.bf16.msra.mxu0 %v59
    %518 = vmatpush.bf16.msra.mxu0 %v58
    %519 = vmatmul.bf16.gmra.mxu0 %v509
    %v520 = vpop.f32.mrf.mxu0
    %v521 = vadd.f32 0.0, %v520
    %v522 = vpop.f32.mrf.mxu0
    %523 = vdwg.mxu0
    %v524 = vadd.f32 %v155, %v521
    %v525 = vxor.u32 %v524, 2147483648
    %v526 = vmul.f32 %v525, 1.442695
    %v527 = vpow.pop %v526
    %v528 = vadd.f32 %v527, 1.0
    %v529 = vrcp.pop %v528
    %v530 = vmul.f32 %v528, %v529
    %v531 = vsub.f32 1.0, %v530
    %v532 = vmul.f32 %v529, %v531
    %v533 = vadd.f32 %v529, %v532
    %vm534 = vweird.f32 %v528
    %vm535 = vweird.f32 %v529
    %vm536 = vmor %vm534, %vm535
    %v537 = vsel %vm536, %v529, %v533
    %v538 = vand.u32 2147483647, %v528
    %vm539 = vcmp.eq.f32.partialorder %v538, 8.507059e+37
    %v540 = vand.u32 %v528, 2147483648
    %v541 = vor.u32 1.1754944e-38, %v540
    %v542 = vsel %vm539, %v541, %v537
    %v543 = vmul.f32 1.0, %v542
    %v544 = vtanh.pop %v524
    %v545 = vmul.f32 %v543, %v497
    %547 = vrot.lane.b32.xlu0 %v544, 32
    %v548 = vpop.permute.xlu0 %547
    %v550 = vmul.f32 %v543, %v548
    %552 = vrot.lane.b32.xlu0 %v550, 32
    %v553 = vpop.permute.xlu0 %552
    %v555 = vadd.f32 %v545, %v553
    %v556 = vtanh.pop %v555
    %558 = vrot.lane.b32.xlu0 %v556, 32
    %v559 = vpop.permute.xlu0 %558
    %v561 = vmul.f32 %v543, %v559
    %v562 = vpack.c.bf16 %v561, %v561
    %564 = vrot.lane.b32.xlu0 %v562, 64
    %v565 = vpop.permute.xlu0 %564
    %v567 = vsel %vm159, %v565, 0
    %569 = vmatpush.bf16.msra.mxu0 0
    %570 = vmatpush.bf16.msra.mxu0 0
    %571 = vmatpush.bf16.msra.mxu0 0
    %572 = vmatpush.bf16.msra.mxu0 0
    %573 = vmatpush.bf16.msra.mxu0 0
    %574 = vmatpush.bf16.msra.mxu0 0
    %575 = vmatpush.bf16.msra.mxu0 %v59
    %576 = vmatpush.bf16.msra.mxu0 %v58
    %577 = vmatmul.bf16.gmra.mxu0 %v567
    %v578 = vpop.f32.mrf.mxu0
    %v579 = vadd.f32 0.0, %v578
    %v580 = vpop.f32.mrf.mxu0
    %581 = vdwg.mxu0
    %v582 = vadd.f32 %v157, %v579
    %v583 = vxor.u32 %v582, 2147483648
    %v584 = vmul.f32 %v583, 1.442695
    %v585 = vpow.pop %v584
    %v586 = vadd.f32 %v585, 1.0
    %v587 = vrcp.pop %v586
    %v588 = vmul.f32 %v586, %v587
    %v589 = vsub.f32 1.0, %v588
    %v590 = vmul.f32 %v587, %v589
    %v591 = vadd.f32 %v587, %v590
    %vm592 = vweird.f32 %v586
    %vm593 = vweird.f32 %v587
    %vm594 = vmor %vm592, %vm593
    %v595 = vsel %vm594, %v587, %v591
    %v596 = vand.u32 2147483647, %v586
    %vm597 = vcmp.eq.f32.partialorder %v596, 8.507059e+37
    %v598 = vand.u32 %v586, 2147483648
    %v599 = vor.u32 1.1754944e-38, %v598
    %v600 = vsel %vm597, %v599, %v595
    %v601 = vmul.f32 1.0, %v600
    %v602 = vtanh.pop %v582
    %v603 = vmul.f32 %v601, %v555
    %605 = vrot.lane.b32.xlu0 %v602, 32
    %v606 = vpop.permute.xlu0 %605
    %v608 = vmul.f32 %v601, %v606
    %610 = vrot.lane.b32.xlu0 %v608, 32
    %v611 = vpop.permute.xlu0 %610
    %v613 = vadd.f32 %v603, %v611
    %v614 = vtanh.pop %v613
    %616 = vrot.lane.b32.xlu0 %v614, 32
    %v617 = vpop.permute.xlu0 %616
    %v619 = vmul.f32 %v601, %v617
    %v620 = vpack.c.bf16 %v619, %v619
    %v621 = vperm.slane %v66, 0
    %623 = vrot.lane.b32.xlu0 %v620, 64
    %v624 = vpop.permute.xlu0 %623
    %v626 = vsel %vm159, %v624, 0
    %628 = vmatpush.bf16.msra.mxu0 0
    %629 = vmatpush.bf16.msra.mxu0 0
    %630 = vmatpush.bf16.msra.mxu0 0
    %631 = vmatpush.bf16.msra.mxu0 0
    %632 = vmatpush.bf16.msra.mxu0 0
    %633 = vmatpush.bf16.msra.mxu0 0
    %634 = vmatpush.bf16.msra.mxu0 %v65
    %635 = vmatpush.bf16.msra.mxu0 %v64
    %636 = vmatmul.bf16.gmra.mxu0 %v626
    %v637 = vpop.f32.mrf.mxu0
    %v638 = vadd.f32 %v621, %v637
    %v639 = vpop.f32.mrf.mxu0
    %640 = vdwg.mxu0
    %641 = vst [vmem:[#allocation5] sm:$0xff] %v638
    // Predicated region
    $region14: #{tpu_custom_call.1} parent=1 // pred_check
      _
    $region15: #{tpu_custom_call.1} parent=1 // pred_check_branch
      %643 = sbr.rel (0) target = $region17
    $region16: #{tpu_custom_call.1} parent=1 // pred_region
      %645 = vsyncadd [#allocation4], 0
      %s647 = sshll.u32 [#allocation5], 4
      %s648 = int_to_ptr.vmem [resolvable:$true] %s647
      %s649 = sshll.u32 %s2, 4
      %s650 = int_to_ptr.hbm [resolvable:$true] %s649
      %652 = dma.vmem_to_hbm [thread:$0]  %s648, 128, %s650, [#allocation4]
    $region17: #{tpu_custom_call.1} parent=1 // pred_fallthru
      _
    // Predicated region
    $region18: #{tpu_custom_call.1} parent=1 // pred_check
      _
    $region19: #{tpu_custom_call.1} parent=1 // pred_check_branch
      %654 = sbr.rel (0) target = $region21
    $region20: #{tpu_custom_call.1} parent=1 // pred_region
      %656 = dma.done [#allocation4], 128
    $region21: #{tpu_custom_call.1} parent=1 // pred_fallthru
      _
    %657 = vsyncpa [#allocation3], 1
    %658 = vsyncpa [#allocation4], 1

</llo_original>
